<compile_context>
chip_gen: v7x
topology: tpu7x:2x2x1
jax: 0.10.0
libtpu: 0.0.40
codegen_flags: <defaults>
</compile_context>

<pallas_src>
import functools

import jax
import jax.numpy as jnp
from jax.experimental import pallas as pl
from jax.experimental.pallas import tpu as pltpu


def _round_up(x, m):
    return (x + m - 1) // m * m


def _bert_embeddings_kernel(
    ids_smem,                # scalar-prefetch: (B * S_pad,) int32 ids in SMEM
    pos_ref,                 # (TOK, H) position-embedding tile (reused across b)
    tt_ids_ref,              # (TOK, 1) token-type ids for this tile
    tt_tab_ref,              # (T, H)   full token-type table (VMEM resident)
    gamma_ref, beta_ref,     # (1, H)   LayerNorm params (VMEM resident)
    word_hbm,                # (V, H)   word-embedding table, left in HBM
    out_ref,                 # (TOK, H) output tile
    wbuf,                    # scratch VMEM (2, TOK, H): double-buffered gather
    sem,                     # scratch DMA semaphores, shape (2,)
    *, eps, s_pad, n_batch,
):
    tok, h = out_ref.shape
    s = pl.program_id(0)          # sequence-tile index (outer, "parallel")
    b = pl.program_id(1)          # batch index (inner, "arbitrary")
    slot = b & 1                  # tile (s, bb) lives in wbuf slot bb & 1

    def issue_tile(bb, sl):
        # Statically unrolled: TOK small row-gather DMAs into wbuf[sl].
        base = bb * s_pad + s * tok
        for r in range(tok):
            row = ids_smem[base + r]
            pltpu.make_async_copy(
                word_hbm.at[pl.ds(row, 1)],      # (1, H) source row
                wbuf.at[sl, pl.ds(r, 1)],        # (1, H) destination row
                sem.at[sl],
            ).start()

    # Prime: the first batch row of this sequence tile gathers its own words.
    @pl.when(b == 0)
    def _():
        issue_tile(0, 0)

    # Prefetch the next batch row's gather so its DMAs hide behind this tile's
    # compute + pipelined output writeback.
    @pl.when(b + 1 < n_batch)
    def _():
        issue_tile(b + 1, 1 - slot)

    # Work that does not depend on the gathered rows (runs while DMAs fly).
    pos = pos_ref[...].astype(jnp.float32)                      # (TOK, H)
    tt_ids = tt_ids_ref[...]                                    # (TOK, 1) int32
    tt_tab = tt_tab_ref[...].astype(jnp.float32)                # (T, H)
    num_types = tt_tab_ref.shape[0]
    if num_types == 2:
        tt_rows = jnp.where(tt_ids == 0, tt_tab[0:1, :], tt_tab[1:2, :])
    else:
        tt_rows = jnp.zeros((tok, h), jnp.float32)
        for t in range(num_types):          # static, tiny loop
            tt_rows = tt_rows + jnp.where(tt_ids == t, 1.0, 0.0) * tt_tab[t:t + 1, :]
    partial = pos + tt_rows

    # Single aggregate wait: the TOK row copies for this tile all signalled
    # sem[slot]; one (TOK, H) descriptor accounts for exactly their byte total.
    pltpu.make_async_copy(
        word_hbm.at[pl.ds(0, tok)], wbuf.at[slot], sem.at[slot]
    ).wait()

    # Sum + LayerNorm over the hidden dim (f32 math), dense (TOK, H) store.
    x = partial + wbuf[slot].astype(jnp.float32)
    mean = jnp.mean(x, axis=-1, keepdims=True)
    c = x - mean
    var = jnp.mean(c * c, axis=-1, keepdims=True)
    y = c * jax.lax.rsqrt(var + eps)
    y = y * gamma_ref[...].astype(jnp.float32) + beta_ref[...].astype(jnp.float32)
    out_ref[...] = y.astype(out_ref.dtype)


def bert_embeddings(
    input_ids,              # (B, S) int32
    token_type_ids,         # (B, S) int32 or None
    word_emb,               # (V, H) f32
    pos_emb,                # (P, H) f32
    tt_emb,                 # (T, H) f32
    ln_gamma,               # (H,)   f32
    ln_beta,                # (H,)   f32
    *,
    eps=1e-12,
    past_key_values_length=0,   # static Python int
    tok_tile=128,               # raise to 256-512 for long sequences (VMEM is
                                # tiny even at TOK=512; amortizes grid overhead)
):
    B, S = input_ids.shape
    V, H = word_emb.shape

    if token_type_ids is None:
        token_type_ids = jnp.zeros((B, S), jnp.int32)

    TOK = min(tok_tile, _round_up(S, 8))
    S_pad = _round_up(S, TOK)
    n_seq_tiles = S_pad // TOK
    n_tok_pad = B * S_pad
    pad_cols = S_pad - S

    # Padded tail tokens point at the pad row and are sliced off at the end.
    ids_flat = jnp.pad(input_ids.astype(jnp.int32),
                       ((0, 0), (0, pad_cols))).reshape(-1)
    tt_2d = jnp.pad(token_type_ids.astype(jnp.int32),
                    ((0, 0), (0, pad_cols))).reshape(-1, 1)

    # Absolute-position path: needed pos_emb rows are a contiguous slice, so
    # they are streamed by a plain blocked BlockSpec (no gather).
    pos_used = pos_emb[past_key_values_length:past_key_values_length + S]
    if pad_cols:
        pos_used = jnp.pad(pos_used, ((0, pad_cols), (0, 0)))

    gamma2d = ln_gamma.reshape(1, H)
    beta2d = ln_beta.reshape(1, H)

    grid_spec = pltpu.PrefetchScalarGridSpec(
        num_scalar_prefetch=1,
        grid=(n_seq_tiles, B),        # inner (fastest) axis = batch
        in_specs=[
            # position tile: same block index across all b -> fetched once per s
            pl.BlockSpec((TOK, H), lambda s, b, ids: (s, 0)),
            # token-type ids for this (s, b) tile
            pl.BlockSpec((TOK, 1), lambda s, b, ids: (b * n_seq_tiles + s, 0)),
            # full token-type table, resident in VMEM
            pl.BlockSpec(tt_emb.shape, lambda s, b, ids: (0, 0)),
            # LayerNorm gamma / beta, resident in VMEM
            pl.BlockSpec((1, H), lambda s, b, ids: (0, 0)),
            pl.BlockSpec((1, H), lambda s, b, ids: (0, 0)),
            # word-embedding table stays in HBM; gathered by manual DMAs
            pl.BlockSpec(memory_space=pl.ANY),
        ],
        out_specs=pl.BlockSpec((TOK, H), lambda s, b, ids: (b * n_seq_tiles + s, 0)),
        scratch_shapes=[
            pltpu.VMEM((2, TOK, H), word_emb.dtype),   # double-buffered gather
            pltpu.SemaphoreType.DMA((2,)),
        ],
    )

    out = pl.pallas_call(
        functools.partial(_bert_embeddings_kernel,
                          eps=eps, s_pad=S_pad, n_batch=B),
        out_shape=jax.ShapeDtypeStruct((n_tok_pad, H), word_emb.dtype),
        grid_spec=grid_spec,
        compiler_params=pltpu.CompilerParams(
            # outer seq-tile axis parallel (v7x megacore); inner batch axis
            # arbitrary — it carries the cross-tile gather prefetch.
            dimension_semantics=("parallel", "arbitrary"),
        ),
    )(ids_flat, pos_used, tt_2d, tt_emb, gamma2d, beta2d, word_emb)

    return out.reshape(B, S_pad, H)[:, :S, :]


def _reference(input_ids, token_type_ids, position_ids, word_emb, pos_emb,
               tt_emb, gamma, beta, eps=1e-12):
    x = word_emb[input_ids] + tt_emb[token_type_ids] + pos_emb[position_ids]
    mean = jnp.mean(x, axis=-1, keepdims=True)
    var = jnp.mean((x - mean) ** 2, axis=-1, keepdims=True)
    return (x - mean) * jax.lax.rsqrt(var + eps) * gamma + beta


if __name__ == "__main__":
    # Config (small, consistent with BertEmbeddings.__init__)
    vocab_size = 100
    hidden_size = 128
    max_position_embeddings = 64
    type_vocab_size = 2
    pad_token_id = 0
    layer_norm_eps = 1e-12

    B, S = 2, 8

    key = jax.random.PRNGKey(0)
    k_w, k_p, k_t, k_ids, k_tt = jax.random.split(key, 5)

    word_emb = 0.02 * jax.random.normal(k_w, (vocab_size, hidden_size), jnp.float32)
    word_emb = word_emb.at[pad_token_id].set(0.0)   # padding_idx row zero-init
    pos_emb = 0.02 * jax.random.normal(k_p, (max_position_embeddings, hidden_size), jnp.float32)
    tt_emb = 0.02 * jax.random.normal(k_t, (type_vocab_size, hidden_size), jnp.float32)
    ln_gamma = jnp.ones((hidden_size,), jnp.float32)
    ln_beta = jnp.zeros((hidden_size,), jnp.float32)

    input_ids = jax.random.randint(k_ids, (B, S), 0, vocab_size, dtype=jnp.int32)
    token_type_ids = jax.random.randint(k_tt, (B, S), 0, type_vocab_size, dtype=jnp.int32)

    out = bert_embeddings(
        input_ids, token_type_ids,
        word_emb, pos_emb, tt_emb, ln_gamma, ln_beta,
        eps=layer_norm_eps,
    )
    out = jax.block_until_ready(out)

    # Reference (module default: position_ids = arange(S), past_kv_len = 0)
    position_ids = jnp.broadcast_to(jnp.arange(S, dtype=jnp.int32)[None, :], (B, S))
    ref = _reference(input_ids, token_type_ids, position_ids,
                     word_emb, pos_emb, tt_emb, ln_gamma, ln_beta,
                     eps=layer_norm_eps)

    assert out.shape == (B, S, hidden_size)
    assert jnp.allclose(out, ref, atol=1e-5, rtol=1e-5), "mismatch vs reference"

    print("KERNEL_OK")
</pallas_src>

<mosaic_0001>
module attributes {stable_mosaic.version = 11 : i64} {
  func.func @_bert_embeddings_kernel(%arg0: i32, %arg1: i32, %arg2: memref<16xi32, #tpu.memory_space<smem>>, %arg3: memref<8x128xf32, #tpu.memory_space<vmem>>, %arg4: memref<8x1xi32, #tpu.memory_space<vmem>>, %arg5: memref<2x128xf32, #tpu.memory_space<vmem>>, %arg6: memref<1x128xf32, #tpu.memory_space<vmem>>, %arg7: memref<1x128xf32, #tpu.memory_space<vmem>>, %arg8: memref<100x128xf32, #tpu.memory_space<any>>, %arg9: memref<8x128xf32, #tpu.memory_space<vmem>>, %arg10: memref<2x8x128xf32, #tpu.memory_space<vmem>>, %arg11: memref<2x!tpu.dma_semaphore, #tpu.memory_space<semaphore_mem>>) attributes {dimension_semantics = [#tpu.dimension_semantics<parallel>, #tpu.dimension_semantics<arbitrary>], iteration_bounds = array<i64: 1, 2>, scalar_prefetch = 1 : i64, scratch_operands = 2 : i64, tpu.core_type = #tpu.core_type<tc>, window_params = [{transform_indices = @transform_0, window_bounds = array<i64: 8, 128>}, {transform_indices = @transform_1, window_bounds = array<i64: 8, 1>}, {pipeline_mode = #tpu.pipeline_mode<synchronous>, transform_indices = @transform_2, window_bounds = array<i64: 2, 128>}, {pipeline_mode = #tpu.pipeline_mode<synchronous>, transform_indices = @transform_3, window_bounds = array<i64: 1, 128>}, {pipeline_mode = #tpu.pipeline_mode<synchronous>, transform_indices = @transform_4, window_bounds = array<i64: 1, 128>}, {}, {transform_indices = @transform_6, window_bounds = array<i64: 8, 128>}]} {
    %c1_i32 = arith.constant 1 : i32
    %0 = arith.andi %arg1, %c1_i32 : i32
    %c0_i32 = arith.constant 0 : i32
    %1 = arith.cmpi eq, %arg1, %c0_i32 : i32
    %2 = arith.extui %1 : i1 to i32
    %c0_i32_0 = arith.constant 0 : i32
    %3 = arith.cmpi ne, %2, %c0_i32_0 : i32
    scf.if %3 {
      %c8_i32 = arith.constant 8 : i32
      %55 = arith.muli %arg0, %c8_i32 : i32
      %c0_i32_25 = arith.constant 0 : i32
      %56 = arith.addi %c0_i32_25, %55 : i32
      %c0_i32_26 = arith.constant 0 : i32
      %57 = arith.addi %56, %c0_i32_26 : i32
      %58 = arith.index_cast %57 : i32 to index
      %59 = memref.load %arg2[%58] : memref<16xi32, #tpu.memory_space<smem>>
      %c0_i32_27 = arith.constant 0 : i32
      %c0_i32_28 = arith.constant 0 : i32
      %c0_i32_29 = arith.constant 0 : i32
      %60 = tpu.memref_slice %arg8[%59, %c0_i32_29] : memref<100x128xf32, #tpu.memory_space<any>> -> memref<1x128xf32, #tpu.memory_space<any>>
      %c0_i32_30 = arith.constant 0 : i32
      %c0_i32_31 = arith.constant 0 : i32
      %61 = tpu.memref_slice %arg10[%c0_i32_27, %c0_i32_30, %c0_i32_31] : memref<2x8x128xf32, #tpu.memory_space<vmem>> -> memref<1x1x128xf32, #tpu.memory_space<vmem>>
      %62 = tpu.memref_squeeze %61 : memref<1x1x128xf32, #tpu.memory_space<vmem>> -> memref<1x128xf32, #tpu.memory_space<vmem>>
      %63 = tpu.memref_slice %arg11[%c0_i32_28] : memref<2x!tpu.dma_semaphore, #tpu.memory_space<semaphore_mem>> -> memref<1x!tpu.dma_semaphore, #tpu.memory_space<semaphore_mem>>
      %64 = tpu.memref_squeeze %63 : memref<1x!tpu.dma_semaphore, #tpu.memory_space<semaphore_mem>> -> memref<!tpu.dma_semaphore, #tpu.memory_space<semaphore_mem>>
      tpu.enqueue_dma source(%60 : memref<1x128xf32, #tpu.memory_space<any>>) target(%62 : memref<1x128xf32, #tpu.memory_space<vmem>>) target_semaphore(%64 : memref<!tpu.dma_semaphore, #tpu.memory_space<semaphore_mem>>)
      %c1_i32_32 = arith.constant 1 : i32
      %65 = arith.addi %56, %c1_i32_32 : i32
      %66 = arith.index_cast %65 : i32 to index
      %67 = memref.load %arg2[%66] : memref<16xi32, #tpu.memory_space<smem>>
      %c0_i32_33 = arith.constant 0 : i32
      %c0_i32_34 = arith.constant 0 : i32
      %c0_i32_35 = arith.constant 0 : i32
      %68 = tpu.memref_slice %arg8[%67, %c0_i32_35] : memref<100x128xf32, #tpu.memory_space<any>> -> memref<1x128xf32, #tpu.memory_space<any>>
      %c1_i32_36 = arith.constant 1 : i32
      %c0_i32_37 = arith.constant 0 : i32
      %69 = tpu.memref_slice %arg10[%c0_i32_33, %c1_i32_36, %c0_i32_37] : memref<2x8x128xf32, #tpu.memory_space<vmem>> -> memref<1x1x128xf32, #tpu.memory_space<vmem>>
      %70 = tpu.memref_squeeze %69 : memref<1x1x128xf32, #tpu.memory_space<vmem>> -> memref<1x128xf32, #tpu.memory_space<vmem>>
      %71 = tpu.memref_slice %arg11[%c0_i32_34] : memref<2x!tpu.dma_semaphore, #tpu.memory_space<semaphore_mem>> -> memref<1x!tpu.dma_semaphore, #tpu.memory_space<semaphore_mem>>
      %72 = tpu.memref_squeeze %71 : memref<1x!tpu.dma_semaphore, #tpu.memory_space<semaphore_mem>> -> memref<!tpu.dma_semaphore, #tpu.memory_space<semaphore_mem>>
      tpu.enqueue_dma source(%68 : memref<1x128xf32, #tpu.memory_space<any>>) target(%70 : memref<1x128xf32, #tpu.memory_space<vmem>>) target_semaphore(%72 : memref<!tpu.dma_semaphore, #tpu.memory_space<semaphore_mem>>)
      %c2_i32_38 = arith.constant 2 : i32
      %73 = arith.addi %56, %c2_i32_38 : i32
      %74 = arith.index_cast %73 : i32 to index
      %75 = memref.load %arg2[%74] : memref<16xi32, #tpu.memory_space<smem>>
      %c0_i32_39 = arith.constant 0 : i32
      %c0_i32_40 = arith.constant 0 : i32
      %c0_i32_41 = arith.constant 0 : i32
      %76 = tpu.memref_slice %arg8[%75, %c0_i32_41] : memref<100x128xf32, #tpu.memory_space<any>> -> memref<1x128xf32, #tpu.memory_space<any>>
      %c2_i32_42 = arith.constant 2 : i32
      %c0_i32_43 = arith.constant 0 : i32
      %77 = tpu.memref_slice %arg10[%c0_i32_39, %c2_i32_42, %c0_i32_43] : memref<2x8x128xf32, #tpu.memory_space<vmem>> -> memref<1x1x128xf32, #tpu.memory_space<vmem>>
      %78 = tpu.memref_squeeze %77 : memref<1x1x128xf32, #tpu.memory_space<vmem>> -> memref<1x128xf32, #tpu.memory_space<vmem>>
      %79 = tpu.memref_slice %arg11[%c0_i32_40] : memref<2x!tpu.dma_semaphore, #tpu.memory_space<semaphore_mem>> -> memref<1x!tpu.dma_semaphore, #tpu.memory_space<semaphore_mem>>
      %80 = tpu.memref_squeeze %79 : memref<1x!tpu.dma_semaphore, #tpu.memory_space<semaphore_mem>> -> memref<!tpu.dma_semaphore, #tpu.memory_space<semaphore_mem>>
      tpu.enqueue_dma source(%76 : memref<1x128xf32, #tpu.memory_space<any>>) target(%78 : memref<1x128xf32, #tpu.memory_space<vmem>>) target_semaphore(%80 : memref<!tpu.dma_semaphore, #tpu.memory_space<semaphore_mem>>)
      %c3_i32 = arith.constant 3 : i32
      %81 = arith.addi %56, %c3_i32 : i32
      %82 = arith.index_cast %81 : i32 to index
      %83 = memref.load %arg2[%82] : memref<16xi32, #tpu.memory_space<smem>>
      %c0_i32_44 = arith.constant 0 : i32
      %c0_i32_45 = arith.constant 0 : i32
      %c0_i32_46 = arith.constant 0 : i32
      %84 = tpu.memref_slice %arg8[%83, %c0_i32_46] : memref<100x128xf32, #tpu.memory_space<any>> -> memref<1x128xf32, #tpu.memory_space<any>>
      %c3_i32_47 = arith.constant 3 : i32
      %c0_i32_48 = arith.constant 0 : i32
      %85 = tpu.memref_slice %arg10[%c0_i32_44, %c3_i32_47, %c0_i32_48] : memref<2x8x128xf32, #tpu.memory_space<vmem>> -> memref<1x1x128xf32, #tpu.memory_space<vmem>>
      %86 = tpu.memref_squeeze %85 : memref<1x1x128xf32, #tpu.memory_space<vmem>> -> memref<1x128xf32, #tpu.memory_space<vmem>>
      %87 = tpu.memref_slice %arg11[%c0_i32_45] : memref<2x!tpu.dma_semaphore, #tpu.memory_space<semaphore_mem>> -> memref<1x!tpu.dma_semaphore, #tpu.memory_space<semaphore_mem>>
      %88 = tpu.memref_squeeze %87 : memref<1x!tpu.dma_semaphore, #tpu.memory_space<semaphore_mem>> -> memref<!tpu.dma_semaphore, #tpu.memory_space<semaphore_mem>>
      tpu.enqueue_dma source(%84 : memref<1x128xf32, #tpu.memory_space<any>>) target(%86 : memref<1x128xf32, #tpu.memory_space<vmem>>) target_semaphore(%88 : memref<!tpu.dma_semaphore, #tpu.memory_space<semaphore_mem>>)
      %c4_i32 = arith.constant 4 : i32
      %89 = arith.addi %56, %c4_i32 : i32
      %90 = arith.index_cast %89 : i32 to index
      %91 = memref.load %arg2[%90] : memref<16xi32, #tpu.memory_space<smem>>
      %c0_i32_49 = arith.constant 0 : i32
      %c0_i32_50 = arith.constant 0 : i32
      %c0_i32_51 = arith.constant 0 : i32
      %92 = tpu.memref_slice %arg8[%91, %c0_i32_51] : memref<100x128xf32, #tpu.memory_space<any>> -> memref<1x128xf32, #tpu.memory_space<any>>
      %c4_i32_52 = arith.constant 4 : i32
      %c0_i32_53 = arith.constant 0 : i32
      %93 = tpu.memref_slice %arg10[%c0_i32_49, %c4_i32_52, %c0_i32_53] : memref<2x8x128xf32, #tpu.memory_space<vmem>> -> memref<1x1x128xf32, #tpu.memory_space<vmem>>
      %94 = tpu.memref_squeeze %93 : memref<1x1x128xf32, #tpu.memory_space<vmem>> -> memref<1x128xf32, #tpu.memory_space<vmem>>
      %95 = tpu.memref_slice %arg11[%c0_i32_50] : memref<2x!tpu.dma_semaphore, #tpu.memory_space<semaphore_mem>> -> memref<1x!tpu.dma_semaphore, #tpu.memory_space<semaphore_mem>>
      %96 = tpu.memref_squeeze %95 : memref<1x!tpu.dma_semaphore, #tpu.memory_space<semaphore_mem>> -> memref<!tpu.dma_semaphore, #tpu.memory_space<semaphore_mem>>
      tpu.enqueue_dma source(%92 : memref<1x128xf32, #tpu.memory_space<any>>) target(%94 : memref<1x128xf32, #tpu.memory_space<vmem>>) target_semaphore(%96 : memref<!tpu.dma_semaphore, #tpu.memory_space<semaphore_mem>>)
      %c5_i32 = arith.constant 5 : i32
      %97 = arith.addi %56, %c5_i32 : i32
      %98 = arith.index_cast %97 : i32 to index
      %99 = memref.load %arg2[%98] : memref<16xi32, #tpu.memory_space<smem>>
      %c0_i32_54 = arith.constant 0 : i32
      %c0_i32_55 = arith.constant 0 : i32
      %c0_i32_56 = arith.constant 0 : i32
      %100 = tpu.memref_slice %arg8[%99, %c0_i32_56] : memref<100x128xf32, #tpu.memory_space<any>> -> memref<1x128xf32, #tpu.memory_space<any>>
      %c5_i32_57 = arith.constant 5 : i32
      %c0_i32_58 = arith.constant 0 : i32
      %101 = tpu.memref_slice %arg10[%c0_i32_54, %c5_i32_57, %c0_i32_58] : memref<2x8x128xf32, #tpu.memory_space<vmem>> -> memref<1x1x128xf32, #tpu.memory_space<vmem>>
      %102 = tpu.memref_squeeze %101 : memref<1x1x128xf32, #tpu.memory_space<vmem>> -> memref<1x128xf32, #tpu.memory_space<vmem>>
      %103 = tpu.memref_slice %arg11[%c0_i32_55] : memref<2x!tpu.dma_semaphore, #tpu.memory_space<semaphore_mem>> -> memref<1x!tpu.dma_semaphore, #tpu.memory_space<semaphore_mem>>
      %104 = tpu.memref_squeeze %103 : memref<1x!tpu.dma_semaphore, #tpu.memory_space<semaphore_mem>> -> memref<!tpu.dma_semaphore, #tpu.memory_space<semaphore_mem>>
      tpu.enqueue_dma source(%100 : memref<1x128xf32, #tpu.memory_space<any>>) target(%102 : memref<1x128xf32, #tpu.memory_space<vmem>>) target_semaphore(%104 : memref<!tpu.dma_semaphore, #tpu.memory_space<semaphore_mem>>)
      %c6_i32 = arith.constant 6 : i32
      %105 = arith.addi %56, %c6_i32 : i32
      %106 = arith.index_cast %105 : i32 to index
      %107 = memref.load %arg2[%106] : memref<16xi32, #tpu.memory_space<smem>>
      %c0_i32_59 = arith.constant 0 : i32
      %c0_i32_60 = arith.constant 0 : i32
      %c0_i32_61 = arith.constant 0 : i32
      %108 = tpu.memref_slice %arg8[%107, %c0_i32_61] : memref<100x128xf32, #tpu.memory_space<any>> -> memref<1x128xf32, #tpu.memory_space<any>>
      %c6_i32_62 = arith.constant 6 : i32
      %c0_i32_63 = arith.constant 0 : i32
      %109 = tpu.memref_slice %arg10[%c0_i32_59, %c6_i32_62, %c0_i32_63] : memref<2x8x128xf32, #tpu.memory_space<vmem>> -> memref<1x1x128xf32, #tpu.memory_space<vmem>>
      %110 = tpu.memref_squeeze %109 : memref<1x1x128xf32, #tpu.memory_space<vmem>> -> memref<1x128xf32, #tpu.memory_space<vmem>>
      %111 = tpu.memref_slice %arg11[%c0_i32_60] : memref<2x!tpu.dma_semaphore, #tpu.memory_space<semaphore_mem>> -> memref<1x!tpu.dma_semaphore, #tpu.memory_space<semaphore_mem>>
      %112 = tpu.memref_squeeze %111 : memref<1x!tpu.dma_semaphore, #tpu.memory_space<semaphore_mem>> -> memref<!tpu.dma_semaphore, #tpu.memory_space<semaphore_mem>>
      tpu.enqueue_dma source(%108 : memref<1x128xf32, #tpu.memory_space<any>>) target(%110 : memref<1x128xf32, #tpu.memory_space<vmem>>) target_semaphore(%112 : memref<!tpu.dma_semaphore, #tpu.memory_space<semaphore_mem>>)
      %c7_i32 = arith.constant 7 : i32
      %113 = arith.addi %56, %c7_i32 : i32
      %114 = arith.index_cast %113 : i32 to index
      %115 = memref.load %arg2[%114] : memref<16xi32, #tpu.memory_space<smem>>
      %c0_i32_64 = arith.constant 0 : i32
      %c0_i32_65 = arith.constant 0 : i32
      %c0_i32_66 = arith.constant 0 : i32
      %116 = tpu.memref_slice %arg8[%115, %c0_i32_66] : memref<100x128xf32, #tpu.memory_space<any>> -> memref<1x128xf32, #tpu.memory_space<any>>
      %c7_i32_67 = arith.constant 7 : i32
      %c0_i32_68 = arith.constant 0 : i32
      %117 = tpu.memref_slice %arg10[%c0_i32_64, %c7_i32_67, %c0_i32_68] : memref<2x8x128xf32, #tpu.memory_space<vmem>> -> memref<1x1x128xf32, #tpu.memory_space<vmem>>
      %118 = tpu.memref_squeeze %117 : memref<1x1x128xf32, #tpu.memory_space<vmem>> -> memref<1x128xf32, #tpu.memory_space<vmem>>
      %119 = tpu.memref_slice %arg11[%c0_i32_65] : memref<2x!tpu.dma_semaphore, #tpu.memory_space<semaphore_mem>> -> memref<1x!tpu.dma_semaphore, #tpu.memory_space<semaphore_mem>>
      %120 = tpu.memref_squeeze %119 : memref<1x!tpu.dma_semaphore, #tpu.memory_space<semaphore_mem>> -> memref<!tpu.dma_semaphore, #tpu.memory_space<semaphore_mem>>
      tpu.enqueue_dma source(%116 : memref<1x128xf32, #tpu.memory_space<any>>) target(%118 : memref<1x128xf32, #tpu.memory_space<vmem>>) target_semaphore(%120 : memref<!tpu.dma_semaphore, #tpu.memory_space<semaphore_mem>>)
    } else {
    }
    %c1_i32_1 = arith.constant 1 : i32
    %4 = arith.addi %arg1, %c1_i32_1 : i32
    %c2_i32 = arith.constant 2 : i32
    %5 = arith.cmpi slt, %4, %c2_i32 : i32
    %6 = arith.extui %5 : i1 to i32
    %c0_i32_2 = arith.constant 0 : i32
    %7 = arith.cmpi ne, %6, %c0_i32_2 : i32
    scf.if %7 {
      %c1_i32_25 = arith.constant 1 : i32
      %55 = arith.addi %arg1, %c1_i32_25 : i32
      %c1_i32_26 = arith.constant 1 : i32
      %56 = arith.subi %c1_i32_26, %0 : i32
      %c8_i32 = arith.constant 8 : i32
      %57 = arith.muli %55, %c8_i32 : i32
      %c8_i32_27 = arith.constant 8 : i32
      %58 = arith.muli %arg0, %c8_i32_27 : i32
      %59 = arith.addi %57, %58 : i32
      %c0_i32_28 = arith.constant 0 : i32
      %60 = arith.addi %59, %c0_i32_28 : i32
      %61 = arith.index_cast %60 : i32 to index
      %62 = memref.load %arg2[%61] : memref<16xi32, #tpu.memory_space<smem>>
      %c0_i32_29 = arith.constant 0 : i32
      %63 = tpu.memref_slice %arg8[%62, %c0_i32_29] : memref<100x128xf32, #tpu.memory_space<any>> -> memref<1x128xf32, #tpu.memory_space<any>>
      %c0_i32_30 = arith.constant 0 : i32
      %c0_i32_31 = arith.constant 0 : i32
      %64 = tpu.memref_slice %arg10[%56, %c0_i32_30, %c0_i32_31] : memref<2x8x128xf32, #tpu.memory_space<vmem>> -> memref<1x1x128xf32, #tpu.memory_space<vmem>>
      %65 = tpu.memref_squeeze %64 : memref<1x1x128xf32, #tpu.memory_space<vmem>> -> memref<1x128xf32, #tpu.memory_space<vmem>>
      %66 = tpu.memref_slice %arg11[%56] : memref<2x!tpu.dma_semaphore, #tpu.memory_space<semaphore_mem>> -> memref<1x!tpu.dma_semaphore, #tpu.memory_space<semaphore_mem>>
      %67 = tpu.memref_squeeze %66 : memref<1x!tpu.dma_semaphore, #tpu.memory_space<semaphore_mem>> -> memref<!tpu.dma_semaphore, #tpu.memory_space<semaphore_mem>>
      tpu.enqueue_dma source(%63 : memref<1x128xf32, #tpu.memory_space<any>>) target(%65 : memref<1x128xf32, #tpu.memory_space<vmem>>) target_semaphore(%67 : memref<!tpu.dma_semaphore, #tpu.memory_space<semaphore_mem>>)
      %c1_i32_32 = arith.constant 1 : i32
      %68 = arith.addi %59, %c1_i32_32 : i32
      %69 = arith.index_cast %68 : i32 to index
      %70 = memref.load %arg2[%69] : memref<16xi32, #tpu.memory_space<smem>>
      %c0_i32_33 = arith.constant 0 : i32
      %71 = tpu.memref_slice %arg8[%70, %c0_i32_33] : memref<100x128xf32, #tpu.memory_space<any>> -> memref<1x128xf32, #tpu.memory_space<any>>
      %c1_i32_34 = arith.constant 1 : i32
      %c0_i32_35 = arith.constant 0 : i32
      %72 = tpu.memref_slice %arg10[%56, %c1_i32_34, %c0_i32_35] : memref<2x8x128xf32, #tpu.memory_space<vmem>> -> memref<1x1x128xf32, #tpu.memory_space<vmem>>
      %73 = tpu.memref_squeeze %72 : memref<1x1x128xf32, #tpu.memory_space<vmem>> -> memref<1x128xf32, #tpu.memory_space<vmem>>
      %74 = tpu.memref_slice %arg11[%56] : memref<2x!tpu.dma_semaphore, #tpu.memory_space<semaphore_mem>> -> memref<1x!tpu.dma_semaphore, #tpu.memory_space<semaphore_mem>>
      %75 = tpu.memref_squeeze %74 : memref<1x!tpu.dma_semaphore, #tpu.memory_space<semaphore_mem>> -> memref<!tpu.dma_semaphore, #tpu.memory_space<semaphore_mem>>
      tpu.enqueue_dma source(%71 : memref<1x128xf32, #tpu.memory_space<any>>) target(%73 : memref<1x128xf32, #tpu.memory_space<vmem>>) target_semaphore(%75 : memref<!tpu.dma_semaphore, #tpu.memory_space<semaphore_mem>>)
      %c2_i32_36 = arith.constant 2 : i32
      %76 = arith.addi %59, %c2_i32_36 : i32
      %77 = arith.index_cast %76 : i32 to index
      %78 = memref.load %arg2[%77] : memref<16xi32, #tpu.memory_space<smem>>
      %c0_i32_37 = arith.constant 0 : i32
      %79 = tpu.memref_slice %arg8[%78, %c0_i32_37] : memref<100x128xf32, #tpu.memory_space<any>> -> memref<1x128xf32, #tpu.memory_space<any>>
      %c2_i32_38 = arith.constant 2 : i32
      %c0_i32_39 = arith.constant 0 : i32
      %80 = tpu.memref_slice %arg10[%56, %c2_i32_38, %c0_i32_39] : memref<2x8x128xf32, #tpu.memory_space<vmem>> -> memref<1x1x128xf32, #tpu.memory_space<vmem>>
      %81 = tpu.memref_squeeze %80 : memref<1x1x128xf32, #tpu.memory_space<vmem>> -> memref<1x128xf32, #tpu.memory_space<vmem>>
      %82 = tpu.memref_slice %arg11[%56] : memref<2x!tpu.dma_semaphore, #tpu.memory_space<semaphore_mem>> -> memref<1x!tpu.dma_semaphore, #tpu.memory_space<semaphore_mem>>
      %83 = tpu.memref_squeeze %82 : memref<1x!tpu.dma_semaphore, #tpu.memory_space<semaphore_mem>> -> memref<!tpu.dma_semaphore, #tpu.memory_space<semaphore_mem>>
      tpu.enqueue_dma source(%79 : memref<1x128xf32, #tpu.memory_space<any>>) target(%81 : memref<1x128xf32, #tpu.memory_space<vmem>>) target_semaphore(%83 : memref<!tpu.dma_semaphore, #tpu.memory_space<semaphore_mem>>)
      %c3_i32 = arith.constant 3 : i32
      %84 = arith.addi %59, %c3_i32 : i32
      %85 = arith.index_cast %84 : i32 to index
      %86 = memref.load %arg2[%85] : memref<16xi32, #tpu.memory_space<smem>>
      %c0_i32_40 = arith.constant 0 : i32
      %87 = tpu.memref_slice %arg8[%86, %c0_i32_40] : memref<100x128xf32, #tpu.memory_space<any>> -> memref<1x128xf32, #tpu.memory_space<any>>
      %c3_i32_41 = arith.constant 3 : i32
      %c0_i32_42 = arith.constant 0 : i32
      %88 = tpu.memref_slice %arg10[%56, %c3_i32_41, %c0_i32_42] : memref<2x8x128xf32, #tpu.memory_space<vmem>> -> memref<1x1x128xf32, #tpu.memory_space<vmem>>
      %89 = tpu.memref_squeeze %88 : memref<1x1x128xf32, #tpu.memory_space<vmem>> -> memref<1x128xf32, #tpu.memory_space<vmem>>
      %90 = tpu.memref_slice %arg11[%56] : memref<2x!tpu.dma_semaphore, #tpu.memory_space<semaphore_mem>> -> memref<1x!tpu.dma_semaphore, #tpu.memory_space<semaphore_mem>>
      %91 = tpu.memref_squeeze %90 : memref<1x!tpu.dma_semaphore, #tpu.memory_space<semaphore_mem>> -> memref<!tpu.dma_semaphore, #tpu.memory_space<semaphore_mem>>
      tpu.enqueue_dma source(%87 : memref<1x128xf32, #tpu.memory_space<any>>) target(%89 : memref<1x128xf32, #tpu.memory_space<vmem>>) target_semaphore(%91 : memref<!tpu.dma_semaphore, #tpu.memory_space<semaphore_mem>>)
      %c4_i32 = arith.constant 4 : i32
      %92 = arith.addi %59, %c4_i32 : i32
      %93 = arith.index_cast %92 : i32 to index
      %94 = memref.load %arg2[%93] : memref<16xi32, #tpu.memory_space<smem>>
      %c0_i32_43 = arith.constant 0 : i32
      %95 = tpu.memref_slice %arg8[%94, %c0_i32_43] : memref<100x128xf32, #tpu.memory_space<any>> -> memref<1x128xf32, #tpu.memory_space<any>>
      %c4_i32_44 = arith.constant 4 : i32
      %c0_i32_45 = arith.constant 0 : i32
      %96 = tpu.memref_slice %arg10[%56, %c4_i32_44, %c0_i32_45] : memref<2x8x128xf32, #tpu.memory_space<vmem>> -> memref<1x1x128xf32, #tpu.memory_space<vmem>>
      %97 = tpu.memref_squeeze %96 : memref<1x1x128xf32, #tpu.memory_space<vmem>> -> memref<1x128xf32, #tpu.memory_space<vmem>>
      %98 = tpu.memref_slice %arg11[%56] : memref<2x!tpu.dma_semaphore, #tpu.memory_space<semaphore_mem>> -> memref<1x!tpu.dma_semaphore, #tpu.memory_space<semaphore_mem>>
      %99 = tpu.memref_squeeze %98 : memref<1x!tpu.dma_semaphore, #tpu.memory_space<semaphore_mem>> -> memref<!tpu.dma_semaphore, #tpu.memory_space<semaphore_mem>>
      tpu.enqueue_dma source(%95 : memref<1x128xf32, #tpu.memory_space<any>>) target(%97 : memref<1x128xf32, #tpu.memory_space<vmem>>) target_semaphore(%99 : memref<!tpu.dma_semaphore, #tpu.memory_space<semaphore_mem>>)
      %c5_i32 = arith.constant 5 : i32
      %100 = arith.addi %59, %c5_i32 : i32
      %101 = arith.index_cast %100 : i32 to index
      %102 = memref.load %arg2[%101] : memref<16xi32, #tpu.memory_space<smem>>
      %c0_i32_46 = arith.constant 0 : i32
      %103 = tpu.memref_slice %arg8[%102, %c0_i32_46] : memref<100x128xf32, #tpu.memory_space<any>> -> memref<1x128xf32, #tpu.memory_space<any>>
      %c5_i32_47 = arith.constant 5 : i32
      %c0_i32_48 = arith.constant 0 : i32
      %104 = tpu.memref_slice %arg10[%56, %c5_i32_47, %c0_i32_48] : memref<2x8x128xf32, #tpu.memory_space<vmem>> -> memref<1x1x128xf32, #tpu.memory_space<vmem>>
      %105 = tpu.memref_squeeze %104 : memref<1x1x128xf32, #tpu.memory_space<vmem>> -> memref<1x128xf32, #tpu.memory_space<vmem>>
      %106 = tpu.memref_slice %arg11[%56] : memref<2x!tpu.dma_semaphore, #tpu.memory_space<semaphore_mem>> -> memref<1x!tpu.dma_semaphore, #tpu.memory_space<semaphore_mem>>
      %107 = tpu.memref_squeeze %106 : memref<1x!tpu.dma_semaphore, #tpu.memory_space<semaphore_mem>> -> memref<!tpu.dma_semaphore, #tpu.memory_space<semaphore_mem>>
      tpu.enqueue_dma source(%103 : memref<1x128xf32, #tpu.memory_space<any>>) target(%105 : memref<1x128xf32, #tpu.memory_space<vmem>>) target_semaphore(%107 : memref<!tpu.dma_semaphore, #tpu.memory_space<semaphore_mem>>)
      %c6_i32 = arith.constant 6 : i32
      %108 = arith.addi %59, %c6_i32 : i32
      %109 = arith.index_cast %108 : i32 to index
      %110 = memref.load %arg2[%109] : memref<16xi32, #tpu.memory_space<smem>>
      %c0_i32_49 = arith.constant 0 : i32
      %111 = tpu.memref_slice %arg8[%110, %c0_i32_49] : memref<100x128xf32, #tpu.memory_space<any>> -> memref<1x128xf32, #tpu.memory_space<any>>
      %c6_i32_50 = arith.constant 6 : i32
      %c0_i32_51 = arith.constant 0 : i32
      %112 = tpu.memref_slice %arg10[%56, %c6_i32_50, %c0_i32_51] : memref<2x8x128xf32, #tpu.memory_space<vmem>> -> memref<1x1x128xf32, #tpu.memory_space<vmem>>
      %113 = tpu.memref_squeeze %112 : memref<1x1x128xf32, #tpu.memory_space<vmem>> -> memref<1x128xf32, #tpu.memory_space<vmem>>
      %114 = tpu.memref_slice %arg11[%56] : memref<2x!tpu.dma_semaphore, #tpu.memory_space<semaphore_mem>> -> memref<1x!tpu.dma_semaphore, #tpu.memory_space<semaphore_mem>>
      %115 = tpu.memref_squeeze %114 : memref<1x!tpu.dma_semaphore, #tpu.memory_space<semaphore_mem>> -> memref<!tpu.dma_semaphore, #tpu.memory_space<semaphore_mem>>
      tpu.enqueue_dma source(%111 : memref<1x128xf32, #tpu.memory_space<any>>) target(%113 : memref<1x128xf32, #tpu.memory_space<vmem>>) target_semaphore(%115 : memref<!tpu.dma_semaphore, #tpu.memory_space<semaphore_mem>>)
      %c7_i32 = arith.constant 7 : i32
      %116 = arith.addi %59, %c7_i32 : i32
      %117 = arith.index_cast %116 : i32 to index
      %118 = memref.load %arg2[%117] : memref<16xi32, #tpu.memory_space<smem>>
      %c0_i32_52 = arith.constant 0 : i32
      %119 = tpu.memref_slice %arg8[%118, %c0_i32_52] : memref<100x128xf32, #tpu.memory_space<any>> -> memref<1x128xf32, #tpu.memory_space<any>>
      %c7_i32_53 = arith.constant 7 : i32
      %c0_i32_54 = arith.constant 0 : i32
      %120 = tpu.memref_slice %arg10[%56, %c7_i32_53, %c0_i32_54] : memref<2x8x128xf32, #tpu.memory_space<vmem>> -> memref<1x1x128xf32, #tpu.memory_space<vmem>>
      %121 = tpu.memref_squeeze %120 : memref<1x1x128xf32, #tpu.memory_space<vmem>> -> memref<1x128xf32, #tpu.memory_space<vmem>>
      %122 = tpu.memref_slice %arg11[%56] : memref<2x!tpu.dma_semaphore, #tpu.memory_space<semaphore_mem>> -> memref<1x!tpu.dma_semaphore, #tpu.memory_space<semaphore_mem>>
      %123 = tpu.memref_squeeze %122 : memref<1x!tpu.dma_semaphore, #tpu.memory_space<semaphore_mem>> -> memref<!tpu.dma_semaphore, #tpu.memory_space<semaphore_mem>>
      tpu.enqueue_dma source(%119 : memref<1x128xf32, #tpu.memory_space<any>>) target(%121 : memref<1x128xf32, #tpu.memory_space<vmem>>) target_semaphore(%123 : memref<!tpu.dma_semaphore, #tpu.memory_space<semaphore_mem>>)
    } else {
    }
    %c0 = arith.constant 0 : index
    %c0_3 = arith.constant 0 : index
    %8 = vector.load %arg3[%c0, %c0_3] : memref<8x128xf32, #tpu.memory_space<vmem>>, vector<8x128xf32>
    %c0_4 = arith.constant 0 : index
    %c0_5 = arith.constant 0 : index
    %9 = vector.load %arg4[%c0_4, %c0_5] : memref<8x1xi32, #tpu.memory_space<vmem>>, vector<8x1xi32>
    %c0_6 = arith.constant 0 : index
    %c0_7 = arith.constant 0 : index
    %10 = vector.load %arg5[%c0_6, %c0_7] : memref<2x128xf32, #tpu.memory_space<vmem>>, vector<2x128xf32>
    %c0_i32_8 = arith.constant 0 : i32
    %11 = vector.broadcast %c0_i32_8 : i32 to vector<8x1xi32>
    %12 = arith.cmpi eq, %9, %11 : vector<8x1xi32>
    %13 = vector.extract_strided_slice %10 {offsets = [0, 0], sizes = [1, 128], strides = [1, 1]} : vector<2x128xf32> to vector<1x128xf32>
    %14 = vector.extract_strided_slice %10 {offsets = [1, 0], sizes = [1, 128], strides = [1, 1]} : vector<2x128xf32> to vector<1x128xf32>
    %15 = vector.shape_cast %12 : vector<8x1xi1> to vector<8x1xi1>
    %16 = vector.broadcast %15 : vector<8x1xi1> to vector<8x128xi1>
    %17 = vector.shape_cast %13 : vector<1x128xf32> to vector<1x128xf32>
    %18 = vector.broadcast %17 : vector<1x128xf32> to vector<8x128xf32>
    %19 = vector.shape_cast %14 : vector<1x128xf32> to vector<1x128xf32>
    %20 = vector.broadcast %19 : vector<1x128xf32> to vector<8x128xf32>
    %21 = arith.select %16, %18, %20 : vector<8x128xi1>, vector<8x128xf32>
    %22 = arith.addf %8, %21 : vector<8x128xf32>
    %c0_i32_9 = arith.constant 0 : i32
    %c0_i32_10 = arith.constant 0 : i32
    %23 = tpu.memref_slice %arg8[%c0_i32_9, %c0_i32_10] : memref<100x128xf32, #tpu.memory_space<any>> -> memref<8x128xf32, #tpu.memory_space<any>>
    %c0_i32_11 = arith.constant 0 : i32
    %c0_i32_12 = arith.constant 0 : i32
    %24 = tpu.memref_slice %arg10[%0, %c0_i32_11, %c0_i32_12] : memref<2x8x128xf32, #tpu.memory_space<vmem>> -> memref<1x8x128xf32, #tpu.memory_space<vmem>>
    %25 = tpu.memref_squeeze %24 : memref<1x8x128xf32, #tpu.memory_space<vmem>> -> memref<8x128xf32, #tpu.memory_space<vmem>>
    %26 = tpu.memref_slice %arg11[%0] : memref<2x!tpu.dma_semaphore, #tpu.memory_space<semaphore_mem>> -> memref<1x!tpu.dma_semaphore, #tpu.memory_space<semaphore_mem>>
    %27 = tpu.memref_squeeze %26 : memref<1x!tpu.dma_semaphore, #tpu.memory_space<semaphore_mem>> -> memref<!tpu.dma_semaphore, #tpu.memory_space<semaphore_mem>>
    tpu.wait_dma2 semaphore(%27 : memref<!tpu.dma_semaphore, #tpu.memory_space<semaphore_mem>>) src(%23 : memref<8x128xf32, #tpu.memory_space<any>>) dst(%25 : memref<8x128xf32, #tpu.memory_space<vmem>>)
    %28 = arith.index_cast %0 : i32 to index
    %c0_13 = arith.constant 0 : index
    %c0_14 = arith.constant 0 : index
    %29 = vector.load %arg10[%28, %c0_13, %c0_14] : memref<2x8x128xf32, #tpu.memory_space<vmem>>, vector<1x8x128xf32>
    %30 = vector.shape_cast %29 : vector<1x8x128xf32> to vector<8x128xf32>
    %31 = arith.addf %22, %30 : vector<8x128xf32>
    %cst = arith.constant dense<0.000000e+00> : vector<8xf32>
    %32 = vector.multi_reduction <add>, %31, %cst [1] : vector<8x128xf32> to vector<8xf32>
    %33 = vector.shape_cast %32 : vector<8xf32> to vector<8x1xf32>
    %cst_15 = arith.constant 1.280000e+02 : f32
    %34 = vector.broadcast %cst_15 : f32 to vector<8x1xf32>
    %35 = arith.divf %33, %34 : vector<8x1xf32>
    %36 = vector.broadcast %35 : vector<8x1xf32> to vector<8x128xf32>
    %37 = arith.subf %31, %36 : vector<8x128xf32>
    %38 = arith.mulf %37, %37 : vector<8x128xf32>
    %cst_16 = arith.constant dense<0.000000e+00> : vector<8xf32>
    %39 = vector.multi_reduction <add>, %38, %cst_16 [1] : vector<8x128xf32> to vector<8xf32>
    %40 = vector.shape_cast %39 : vector<8xf32> to vector<8x1xf32>
    %cst_17 = arith.constant 1.280000e+02 : f32
    %41 = vector.broadcast %cst_17 : f32 to vector<8x1xf32>
    %42 = arith.divf %40, %41 : vector<8x1xf32>
    %cst_18 = arith.constant 9.99999996E-13 : f32
    %43 = vector.broadcast %cst_18 : f32 to vector<8x1xf32>
    %44 = arith.addf %42, %43 : vector<8x1xf32>
    %45 = math.rsqrt %44 : vector<8x1xf32>
    %46 = vector.broadcast %45 : vector<8x1xf32> to vector<8x128xf32>
    %47 = arith.mulf %37, %46 : vector<8x128xf32>
    %c0_19 = arith.constant 0 : index
    %c0_20 = arith.constant 0 : index
    %48 = vector.load %arg6[%c0_19, %c0_20] : memref<1x128xf32, #tpu.memory_space<vmem>>, vector<1x128xf32>
    %49 = vector.broadcast %48 : vector<1x128xf32> to vector<8x128xf32>
    %50 = arith.mulf %47, %49 : vector<8x128xf32>
    %c0_21 = arith.constant 0 : index
    %c0_22 = arith.constant 0 : index
    %51 = vector.load %arg7[%c0_21, %c0_22] : memref<1x128xf32, #tpu.memory_space<vmem>>, vector<1x128xf32>
    %52 = vector.broadcast %51 : vector<1x128xf32> to vector<8x128xf32>
    %53 = arith.addf %50, %52 : vector<8x128xf32>
    %c0_23 = arith.constant 0 : index
    %c0_24 = arith.constant 0 : index
    %54 = vector.load %arg9[%c0_23, %c0_24] : memref<8x128xf32, #tpu.memory_space<vmem>>, vector<8x128xf32>
    tpu.vector_store %arg9[%c0_23, %c0_24], %53 {strides = array<i32>} : memref<8x128xf32, #tpu.memory_space<vmem>>, vector<8x128xf32>,
    return
  }
  func.func @transform_0(%arg0: i32, %arg1: i32, %arg2: memref<16xi32, #tpu.memory_space<smem>>) -> (i32, i32) {
    %c0_i32 = arith.constant 0 : i32
    %c0_i32_0 = arith.constant 0 : i32
    return %arg0, %c0_i32 : i32, i32
  }
  func.func @transform_1(%arg0: i32, %arg1: i32, %arg2: memref<16xi32, #tpu.memory_space<smem>>) -> (i32, i32) {
    %c1_i32 = arith.constant 1 : i32
    %0 = arith.muli %arg1, %c1_i32 : i32
    %1 = arith.addi %0, %arg0 : i32
    %c0_i32 = arith.constant 0 : i32
    %c0_i32_0 = arith.constant 0 : i32
    return %1, %c0_i32 : i32, i32
  }
  func.func @transform_2(%arg0: i32, %arg1: i32, %arg2: memref<16xi32, #tpu.memory_space<smem>>) -> (i32, i32) {
    %c0_i32 = arith.constant 0 : i32
    %c0_i32_0 = arith.constant 0 : i32
    %c0_i32_1 = arith.constant 0 : i32
    return %c0_i32, %c0_i32_0 : i32, i32
  }
  func.func @transform_3(%arg0: i32, %arg1: i32, %arg2: memref<16xi32, #tpu.memory_space<smem>>) -> (i32, i32) {
    %c0_i32 = arith.constant 0 : i32
    %c0_i32_0 = arith.constant 0 : i32
    %c0_i32_1 = arith.constant 0 : i32
    return %c0_i32, %c0_i32_0 : i32, i32
  }
  func.func @transform_4(%arg0: i32, %arg1: i32, %arg2: memref<16xi32, #tpu.memory_space<smem>>) -> (i32, i32) {
    %c0_i32 = arith.constant 0 : i32
    %c0_i32_0 = arith.constant 0 : i32
    %c0_i32_1 = arith.constant 0 : i32
    return %c0_i32, %c0_i32_0 : i32, i32
  }
  func.func @transform_6(%arg0: i32, %arg1: i32, %arg2: memref<16xi32, #tpu.memory_space<smem>>) -> (i32, i32) {
    %c1_i32 = arith.constant 1 : i32
    %0 = arith.muli %arg1, %c1_i32 : i32
    %1 = arith.addi %0, %arg0 : i32
    %c0_i32 = arith.constant 0 : i32
    %c0_i32_0 = arith.constant 0 : i32
    return %1, %c0_i32 : i32, i32
  }
}

</mosaic_0001>

<llo_original>
// kernel: tpu_custom_call.1
$region0: #{tpu_custom_call.1}
  #allocation0 [shape = 'u32[]', space=smem, size = 0x4, offset = 0x4, fixed_abs, tag = 'smem constant byte address 0x4 - core index']
  #allocation1 [shape = 'u32[144,128]{1,0:T(1,128)}', space=vmem, size = 0x12000, scoped, tag = 'internal scratch']
  #allocation2 [shape = 'f32[2,8,128]{2,1,0:T(8,128)}', space=vmem, size = 0x2000, scoped, tag = 'scratch operand']
  #allocation3 [shape = 's32[2]{0}', space=sflag, size = 0x8, scoped, tag = 'scratch operand']
  #allocation4 [shape = 's32[1]{0}', space=sflag, size = 0x4, scoped, tag = 'scoped memory for tpu_custom_call.1']
  #allocation5 [shape = 'u8[512]{0}', space=smem, size = 0x200, scoped, tag = 'prefetched SMEM operand 0']
  #allocation8 [shape = 's32[]', space=sflag, size = 0x4, offset = 0, fixed_abs, tag = 'sflag constant byte address 0x0 - dummy sync flag']
  #allocation9 [shape = 's32[]', space=sflag, size = 0x4, offset = 0, fixed_abs, tag = 'sflag constant byte address 0x0 - dummy sync flag']
  #allocation10 [shape = 'u32[]', space=smem, size = 0x4, offset = 0x44, fixed_abs, tag = 'smem constant byte address 0x44 - assertion arg 0']
  #allocation11 [shape = 'u32[]', space=smem, size = 0x4, offset = 0x48, fixed_abs, tag = 'smem constant byte address 0x48 - assertion arg 1']
  #allocation12 [shape = 's32[]', space=sflag, size = 0x4, offset = 0, fixed_abs, tag = 'sflag constant byte address 0x0 - dummy sync flag']
  #allocation13 [shape = 's32[]', space=sflag, size = 0x4, offset = 0, fixed_abs, tag = 'sflag constant byte address 0x0 - dummy sync flag']
  #allocation14 [shape = 's32[]', space=sflag, size = 0x4, offset = 0, fixed_abs, tag = 'sflag constant byte address 0x0 - dummy sync flag']
  #allocation15 [shape = 's32[]', space=sflag, size = 0x4, offset = 0, fixed_abs, tag = 'sflag constant byte address 0x0 - dummy sync flag']
  #allocation16 [shape = 's32[]', space=sflag, size = 0x4, offset = 0, fixed_abs, tag = 'sflag constant byte address 0x0 - dummy sync flag']
  #allocation17 [shape = 's32[]', space=sflag, size = 0x4, offset = 0, fixed_abs, tag = 'sflag constant byte address 0x0 - dummy sync flag']
  #allocation18 [shape = 's32[]', space=sflag, size = 0x4, offset = 0, fixed_abs, tag = 'sflag constant byte address 0x0 - dummy sync flag']
  #allocation19 [shape = 's32[]', space=sflag, size = 0x4, offset = 0, fixed_abs, tag = 'sflag constant byte address 0x0 - dummy sync flag']
  #allocation20 [shape = 's32[]', space=sflag, size = 0x4, offset = 0, fixed_abs, tag = 'sflag constant byte address 0x0 - dummy sync flag']
  #allocation21 [shape = 's32[]', space=sflag, size = 0x4, offset = 0, fixed_abs, tag = 'sflag constant byte address 0x0 - dummy sync flag']
  #allocation22 [shape = 's32[]', space=sflag, size = 0x4, offset = 0, fixed_abs, tag = 'sflag constant byte address 0x0 - dummy sync flag']
  #allocation23 [shape = 's32[]', space=sflag, size = 0x4, offset = 0, fixed_abs, tag = 'sflag constant byte address 0x0 - dummy sync flag']
  #allocation24 [shape = 's32[]', space=sflag, size = 0x4, offset = 0, fixed_abs, tag = 'sflag constant byte address 0x0 - dummy sync flag']
  #allocation25 [shape = 's32[]', space=sflag, size = 0x4, offset = 0, fixed_abs, tag = 'sflag constant byte address 0x0 - dummy sync flag']
  #allocation26 [shape = 's32[]', space=sflag, size = 0x4, offset = 0, fixed_abs, tag = 'sflag constant byte address 0x0 - dummy sync flag']
  #allocation27 [shape = 's32[]', space=sflag, size = 0x4, offset = 0, fixed_abs, tag = 'sflag constant byte address 0x0 - dummy sync flag']
  #allocation28 [shape = 's32[]', space=sflag, size = 0x4, offset = 0, fixed_abs, tag = 'sflag constant byte address 0x0 - dummy sync flag']
  #allocation29 [shape = 's32[]', space=sflag, size = 0x4, offset = 0, fixed_abs, tag = 'sflag constant byte address 0x0 - dummy sync flag']
  #allocation30 [shape = 's32[]', space=sflag, size = 0x4, offset = 0, fixed_abs, tag = 'sflag constant byte address 0x0 - dummy sync flag']
  #allocation31 [shape = 's32[]', space=sflag, size = 0x4, offset = 0, fixed_abs, tag = 'sflag constant byte address 0x0 - dummy sync flag']
  #allocation32 [shape = 's32[]', space=sflag, size = 0x4, offset = 0, fixed_abs, tag = 'sflag constant byte address 0x0 - dummy sync flag']
  #allocation33 [shape = 's32[]', space=sflag, size = 0x4, offset = 0, fixed_abs, tag = 'sflag constant byte address 0x0 - dummy sync flag']
  #allocation34 [shape = 's32[]', space=sflag, size = 0x4, offset = 0, fixed_abs, tag = 'sflag constant byte address 0x0 - dummy sync flag']
  #allocation35 [shape = 's32[]', space=sflag, size = 0x4, offset = 0, fixed_abs, tag = 'sflag constant byte address 0x0 - dummy sync flag']
  #allocation36 [shape = 's32[]', space=sflag, size = 0x4, offset = 0, fixed_abs, tag = 'sflag constant byte address 0x0 - dummy sync flag']
  #allocation37 [shape = 's32[]', space=sflag, size = 0x4, offset = 0, fixed_abs, tag = 'sflag constant byte address 0x0 - dummy sync flag']
  #allocation38 [shape = 's32[]', space=sflag, size = 0x4, offset = 0, fixed_abs, tag = 'sflag constant byte address 0x0 - dummy sync flag']
  #allocation39 [shape = 's32[]', space=sflag, size = 0x4, offset = 0, fixed_abs, tag = 'sflag constant byte address 0x0 - dummy sync flag']
  #allocation40 [shape = 's32[]', space=sflag, size = 0x4, offset = 0, fixed_abs, tag = 'sflag constant byte address 0x0 - dummy sync flag']
  #allocation41 [shape = 's32[]', space=sflag, size = 0x4, offset = 0, fixed_abs, tag = 'sflag constant byte address 0x0 - dummy sync flag']
  %s0 = inlined_call_operand.vmem [shape: s32[16], index: 0, kind: input, shape index: {}]
  %s1 = inlined_call_operand.vmem [shape: f32[8,128], index: 1, kind: input, shape index: {}]
  %s2 = inlined_call_operand.vmem [shape: s32[16,1], index: 2, kind: input, shape index: {}]
  %s3 = inlined_call_operand.vmem [shape: f32[2,128], index: 3, kind: input, shape index: {}]
  %s4 = inlined_call_operand.vmem [shape: f32[1,128], index: 4, kind: input, shape index: {}]
  %s5 = inlined_call_operand.vmem [shape: f32[1,128], index: 5, kind: input, shape index: {}]
  %s6 = inlined_call_operand.hbm [shape: f32[100,128], index: 6, kind: input, shape index: {}]
  %s7 = inlined_call_operand.hbm [shape: f32[16,128], index: 7, kind: output, shape index: {}]
  %s8 = sld [smem:[#allocation0]]
  $region125: #{tpu_custom_call.1} parent=0
    _
  %s10 = ssub.s32 1, %s8
  %s11 = scalar_select 0, %s10, %s8
  %s12 = sshll.u32 %s0, 4
  %s13 = int_to_ptr.vmem [resolvable:$true] %s12
  %15 = dma.vmem_to_smem %s13, 16, [#allocation5], [#allocation4]
  %16 = dma.done [#allocation4], 16
  %17 = sfence
  $region1: #{tpu_custom_call.1} parent=0
    #allocation6 [shape = 'u8[8192]{0}', space=vmem, size = 0x2000, scoped, tag = 'output window, operand 0']
    #allocation7 [shape = 's32[2]{0}', space=sflag, size = 0x8, scoped, tag = 'scoped memory for tpu_custom_call.1']
    %18 = vsyncpa [#allocation7], 0
    %s19 = scalar_lea.sflag [#allocation7], 1
    %20 = vsyncpa %s19, 0
    loop: start=0, step=1, limit=4
    $region2: #{tpu_custom_call.1} parent=1 // loop_pre_header
      _
    $region3: #{tpu_custom_call.1} parent=1 // loop_header
      %s22 = sphi 0, %s26
      %p23 = scmp.ge.s32.totalorder %s22, 4
      %s29 = sphi 0, %s41
      %s30 = sphi 0, %s37
      %s31 = sphi 0, %s29
      %s32 = sphi 0, %s30
      %s33 = sphi 0, %s31
      %s34 = sphi 0, %s32
      %s44 = sphi 0, %s46
      %s47 = sphi 0, %s44
      %s48 = sphi 0, %s47
      %s64 = sphi 0, %s48
      %s72 = sphi 0, %s74
      %s75 = sphi 0, %s72
      %s76 = sphi 0, %s75
      %s92 = sphi 0, %s76
      %s96 = sphi 0, %s96
      %s98 = sphi 0, %s96
      %s99 = sphi 0, %s98
      %s113 = sphi 0, %s99
      %s117 = sphi 0, %s117
      %s119 = sphi 0, %s117
      %s120 = sphi 0, %s119
      %s134 = sphi 0, %s120
      %s138 = sphi 0, %s138
      %s140 = sphi 0, %s138
      %s141 = sphi 0, %s140
      %s155 = sphi 0, %s141
      %s163 = sphi 0, %s165
      %s166 = sphi 0, %s163
      %s167 = sphi 0, %s166
      %s183 = sphi 0, %s167
    $region4: #{tpu_custom_call.1} parent=1 // loop_header_branch
      %25 = sbr.rel (%p23) target = $region8
    $region5: #{tpu_custom_call.1} parent=1 // loop_body
      %s27 = ssub.s32 %s22, 1
      %s28 = ssub.s32 %s22, 2
      %s35 = sadd.s32 1, %s30
      %p36 = scmp.ge.s32.totalorder %s35, 2
      %s37 = scalar_select %p36, 0, %s35
      %s38 = sadd.s32 1, %s29
      %s39 = scalar_select %p36, %s38, %s29
      %p40 = scmp.ge.s32.totalorder %s39, 1
      %s41 = scalar_select %p40, 0, %s39
      %s42 = ssub.s32 %s29, %s41
      %p43 = scmp.eq.s32.totalorder %s42, 0
      %s45 = sadd.s32 %s44, 1
      %s46 = scalar_select %p43, %s44, %s45
      %p49 = pneg %p43
      %p50 = scmp.eq.s32.totalorder %s22, 1
      %p51 = por %p49, %p50
      %p52 = scmp.ne.s32.totalorder %s44, %s47
      %p53 = scmp.eq.s32.totalorder %s22, 0
      %p54 = por %p52, %p53
      %p55 = scmp.ne.s32.totalorder %s44, %s47
      %p56 = scmp.eq.s32.totalorder %s27, 1
      %p57 = por %p55, %p56
      %p58 = scmp.ne.s32.totalorder %s47, %s48
      %p59 = scmp.eq.s32.totalorder %s27, 0
      %p60 = por %p58, %p59
      %p61 = scmp.ne.s32.totalorder %s47, %s48
      %p62 = scmp.eq.s32.totalorder %s28, 1
      %p63 = por %p61, %p62
      %p65 = scmp.ne.s32.totalorder %s48, %s64
      %p66 = scmp.eq.s32.totalorder %s28, 0
      %p67 = por %p65, %p66
      %s68 = sadd.s32 %s30, %s29
      %s69 = sadd.s32 %s37, %s41
      %s70 = ssub.s32 %s68, %s69
      %p71 = scmp.eq.s32.totalorder %s70, 0
      %s73 = sadd.s32 %s72, 1
      %s74 = scalar_select %p71, %s72, %s73
      %p77 = pneg %p71
      %p78 = scmp.eq.s32.totalorder %s22, 1
      %p79 = por %p77, %p78
      %p80 = scmp.ne.s32.totalorder %s72, %s75
      %p81 = scmp.eq.s32.totalorder %s22, 0
      %p82 = por %p80, %p81
      %p83 = scmp.ne.s32.totalorder %s72, %s75
      %p84 = scmp.eq.s32.totalorder %s27, 1
      %p85 = por %p83, %p84
      %p86 = scmp.ne.s32.totalorder %s75, %s76
      %p87 = scmp.eq.s32.totalorder %s27, 0
      %p88 = por %p86, %p87
      %p89 = scmp.ne.s32.totalorder %s75, %s76
      %p90 = scmp.eq.s32.totalorder %s28, 1
      %p91 = por %p89, %p90
      %p93 = scmp.ne.s32.totalorder %s76, %s92
      %p94 = scmp.eq.s32.totalorder %s28, 0
      %p95 = por %p93, %p94
      %s97 = sadd.s32 %s96, 1
      %p100 = scmp.eq.s32.totalorder %s22, 1
      %p101 = scmp.ne.s32.totalorder %s96, %s98
      %p102 = scmp.eq.s32.totalorder %s22, 0
      %p103 = por %p101, %p102
      %p104 = scmp.ne.s32.totalorder %s96, %s98
      %p105 = scmp.eq.s32.totalorder %s27, 1
      %p106 = por %p104, %p105
      %p107 = scmp.ne.s32.totalorder %s98, %s99
      %p108 = scmp.eq.s32.totalorder %s27, 0
      %p109 = por %p107, %p108
      %p110 = scmp.ne.s32.totalorder %s98, %s99
      %p111 = scmp.eq.s32.totalorder %s28, 1
      %p112 = por %p110, %p111
      %p114 = scmp.ne.s32.totalorder %s99, %s113
      %p115 = scmp.eq.s32.totalorder %s28, 0
      %p116 = por %p114, %p115
      %s118 = sadd.s32 %s117, 1
      %p121 = scmp.eq.s32.totalorder %s22, 1
      %p122 = scmp.ne.s32.totalorder %s117, %s119
      %p123 = scmp.eq.s32.totalorder %s22, 0
      %p124 = por %p122, %p123
      %p125 = scmp.ne.s32.totalorder %s117, %s119
      %p126 = scmp.eq.s32.totalorder %s27, 1
      %p127 = por %p125, %p126
      %p128 = scmp.ne.s32.totalorder %s119, %s120
      %p129 = scmp.eq.s32.totalorder %s27, 0
      %p130 = por %p128, %p129
      %p131 = scmp.ne.s32.totalorder %s119, %s120
      %p132 = scmp.eq.s32.totalorder %s28, 1
      %p133 = por %p131, %p132
      %p135 = scmp.ne.s32.totalorder %s120, %s134
      %p136 = scmp.eq.s32.totalorder %s28, 0
      %p137 = por %p135, %p136
      %s139 = sadd.s32 %s138, 1
      %p142 = scmp.eq.s32.totalorder %s22, 1
      %p143 = scmp.ne.s32.totalorder %s138, %s140
      %p144 = scmp.eq.s32.totalorder %s22, 0
      %p145 = por %p143, %p144
      %p146 = scmp.ne.s32.totalorder %s138, %s140
      %p147 = scmp.eq.s32.totalorder %s27, 1
      %p148 = por %p146, %p147
      %p149 = scmp.ne.s32.totalorder %s140, %s141
      %p150 = scmp.eq.s32.totalorder %s27, 0
      %p151 = por %p149, %p150
      %p152 = scmp.ne.s32.totalorder %s140, %s141
      %p153 = scmp.eq.s32.totalorder %s28, 1
      %p154 = por %p152, %p153
      %p156 = scmp.ne.s32.totalorder %s141, %s155
      %p157 = scmp.eq.s32.totalorder %s28, 0
      %p158 = por %p156, %p157
      %s159 = sadd.s32 %s30, %s29
      %s160 = sadd.s32 %s37, %s41
      %s161 = ssub.s32 %s159, %s160
      %p162 = scmp.eq.s32.totalorder %s161, 0
      %s164 = sadd.s32 %s163, 1
      %s165 = scalar_select %p162, %s163, %s164
      %p168 = pneg %p162
      %p169 = scmp.eq.s32.totalorder %s22, 1
      %p170 = por %p168, %p169
      %p171 = scmp.ne.s32.totalorder %s163, %s166
      %p172 = scmp.eq.s32.totalorder %s22, 0
      %p173 = por %p171, %p172
      %p174 = scmp.ne.s32.totalorder %s163, %s166
      %p175 = scmp.eq.s32.totalorder %s27, 1
      %p176 = por %p174, %p175
      %p177 = scmp.ne.s32.totalorder %s166, %s167
      %p178 = scmp.eq.s32.totalorder %s27, 0
      %p179 = por %p177, %p178
      %p180 = scmp.ne.s32.totalorder %s166, %s167
      %p181 = scmp.eq.s32.totalorder %s28, 1
      %p182 = por %p180, %p181
      %p184 = scmp.ne.s32.totalorder %s167, %s183
      %p185 = scmp.eq.s32.totalorder %s28, 0
      %p186 = por %p184, %p185
      %p187 = scmp.le.s32.totalorder 1, %s22
      %p188 = scmp.lt.s32.totalorder %s22, 3
      %p189 = pnand %p187, %p188
      %p190 = pneg %p189
      // Predicated region
      $region9: #{tpu_custom_call.1} parent=5 // pred_check
        _
      $region10: #{tpu_custom_call.1} parent=5 // pred_check_branch
        %192 = sbr.rel (%p189) target = $region12
      $region11: #{tpu_custom_call.1} parent=5 // pred_region
        %s193 = ssub.s32 %s22, 1
        // Predicated region
        $region13: #{tpu_custom_call.1} parent=11 // pred_check
          %p194 = pneg %p60
        $region14: #{tpu_custom_call.1} parent=11 // pred_check_branch
          %196 = sbr.rel (%p194) target = $region16
        $region15: #{tpu_custom_call.1} parent=11 // pred_region
          %p197 = scmp.lt.s32.totalorder %s31, 0
          %s198 = scalar_select %p197, %s31, 0
          %s199 = smul.addr %s198, 8
          %s200 = scalar_lea.vmem %s1, %s199
        $region16: #{tpu_custom_call.1} parent=11 // pred_fallthru
          _
        // Predicated region
        $region17: #{tpu_custom_call.1} parent=11 // pred_check
          %p201 = pneg %p109
        $region18: #{tpu_custom_call.1} parent=11 // pred_check_branch
          %203 = sbr.rel (%p201) target = $region20
        $region19: #{tpu_custom_call.1} parent=11 // pred_region
          _
        $region20: #{tpu_custom_call.1} parent=11 // pred_fallthru
          _
        // Predicated region
        $region21: #{tpu_custom_call.1} parent=11 // pred_check
          %p204 = pneg %p130
        $region22: #{tpu_custom_call.1} parent=11 // pred_check_branch
          %206 = sbr.rel (%p204) target = $region24
        $region23: #{tpu_custom_call.1} parent=11 // pred_region
          _
        $region24: #{tpu_custom_call.1} parent=11 // pred_fallthru
          _
        // Predicated region
        $region25: #{tpu_custom_call.1} parent=11 // pred_check
          %p207 = pneg %p151
        $region26: #{tpu_custom_call.1} parent=11 // pred_check_branch
          %209 = sbr.rel (%p207) target = $region28
        $region27: #{tpu_custom_call.1} parent=11 // pred_region
          _
        $region28: #{tpu_custom_call.1} parent=11 // pred_fallthru
          _
      $region12: #{tpu_custom_call.1} parent=5 // pred_fallthru
        _
      %p210 = scmp.lt.s32.totalorder %s22, 2
      // Predicated region
      $region29: #{tpu_custom_call.1} parent=5 // pred_check
        %p211 = pneg %p210
      $region30: #{tpu_custom_call.1} parent=5 // pred_check_branch
        %213 = sbr.rel (%p211) target = $region32
      $region31: #{tpu_custom_call.1} parent=5 // pred_region
        // Predicated region
        $region33: #{tpu_custom_call.1} parent=31 // pred_check
          %p214 = pneg %p82
        $region34: #{tpu_custom_call.1} parent=31 // pred_check_branch
          %216 = sbr.rel (%p214) target = $region36
        $region35: #{tpu_custom_call.1} parent=31 // pred_region
          %s217 = sadd.s32 %s30, %s29
          %p218 = scmp.lt.s32.totalorder %s217, 1
          %s219 = scalar_select %p218, %s217, 1
          %s220 = smul.addr %s219, 8
          %s221 = scalar_lea.vmem %s2, %s220
          %s222 = sadd.s32 %s30, %s29
        $region36: #{tpu_custom_call.1} parent=31 // pred_fallthru
          _
      $region32: #{tpu_custom_call.1} parent=5 // pred_fallthru
        _
      %p223 = scmp.le.s32.totalorder 1, %s22
      %p224 = scmp.lt.s32.totalorder %s22, 3
      %p225 = pnand %p223, %p224
      %p226 = pneg %p225
      // Predicated region
      $region37: #{tpu_custom_call.1} parent=5 // pred_check
        _
      $region38: #{tpu_custom_call.1} parent=5 // pred_check_branch
        %228 = sbr.rel (%p225) target = $region40
      $region39: #{tpu_custom_call.1} parent=5 // pred_region
        %s229 = ssub.s32 %s22, 1
        %p230 = scmp.lt.s32.totalorder %s31, 0
        %s231 = scalar_select %p230, %s31, 0
        %s232 = smul.addr %s231, 8
        %s233 = scalar_lea.vmem %s1, %s232
        %p234 = pneg %p60
        %p235 = pneg %p57
        %s236 = sadd.s32 %s32, %s31
        %p237 = scmp.lt.s32.totalorder %s236, 1
        %s238 = scalar_select %p237, %s236, 1
        %s239 = smul.addr %s238, 8
        %s240 = scalar_lea.vmem %s2, %s239
        %p241 = pneg %p88
        %p242 = pneg %p85
        %p243 = pneg %p109
        %p244 = pneg %p106
        %p245 = pneg %p130
        %p246 = pneg %p127
        %p247 = pneg %p151
        %p248 = pneg %p148
        %p249 = pneg %p179
        %p250 = pneg %p176
        %s251 = sand.u32 %s166, 1
        %s252 = scalar_lea.sflag [#allocation7], %s251
        %s253 = sand.u32 %s166, 1
        %s254 = smul.addr %s253, 8
        %s255 = scalar_lea.vmem [#allocation6], %s254
        %p256 = scmp.lt.s32.totalorder %s31, 0
        %s257 = scalar_select %p256, %s31, 0
        %s258 = smul.addr %s257, 8
        %s259 = scalar_lea.vmem %s1, %s258
        %s260 = sadd.s32 %s32, %s31
        %p261 = scmp.lt.s32.totalorder %s260, 1
        %s262 = scalar_select %p261, %s260, 1
        %s263 = smul.addr %s262, 8
        %s264 = scalar_lea.vmem %s2, %s263
        %s265 = sadd.s32 %s32, %s31
        %s266 = sadd.s32 %s32, %s31
        %s267 = sand.u32 %s32, 1
        %p268 = scmp.eq.s32.totalorder %s32, 0
        // Predicated region
        $region41: #{tpu_custom_call.1} parent=39 // pred_check
          %p269 = pneg %p268
        $region42: #{tpu_custom_call.1} parent=39 // pred_check_branch
          %271 = sbr.rel (%p269) target = $region44
        $region43: #{tpu_custom_call.1} parent=39 // pred_region
          %s272 = smul.u32 %s31, 8
          %s273 = sld [smem:[#allocation5 + %s272]]
          %s274 = smul.addr %s273, 16
          %s275 = scalar_lea.hbm %s6, %s274
          // Predicated region
          $region45: #{tpu_custom_call.1} parent=43 // pred_check
            _
          $region46: #{tpu_custom_call.1} parent=43 // pred_check_branch
            %277 = sbr.rel target = $region48
          $region47: #{tpu_custom_call.1} parent=43 // pred_region
            %278 = sst [smem:[#allocation10]] [#allocation9]
            %279 = sst [smem:[#allocation11]] [#allocation8]
          $region48: #{tpu_custom_call.1} parent=43 // pred_fallthru
            _
          %281 = shalt.err (0)
          %s283 = sshll.u32 [#allocation2], 4
          %s284 = int_to_ptr.vmem [resolvable:$true] %s283
          %286 = dma.hbm_to_vmem [thread:$0]  %s275, 16, %s284, [#allocation3]
          %s287 = sadd.s32 %s272, 1
          %s288 = sld [smem:[#allocation5 + %s287]]
          %s289 = smul.addr %s288, 16
          %s290 = scalar_lea.hbm %s6, %s289
          %s291 = scalar_lea.vmem [#allocation2], 1
          // Predicated region
          $region49: #{tpu_custom_call.1} parent=43 // pred_check
            _
          $region50: #{tpu_custom_call.1} parent=43 // pred_check_branch
            %293 = sbr.rel target = $region52
          $region51: #{tpu_custom_call.1} parent=43 // pred_region
            %294 = sst [smem:[#allocation10]] [#allocation13]
            %295 = sst [smem:[#allocation11]] [#allocation12]
          $region52: #{tpu_custom_call.1} parent=43 // pred_fallthru
            _
          %297 = shalt.err (0)
          %s299 = sshll.u32 %s291, 4
          %s300 = int_to_ptr.vmem [resolvable:$true] %s299
          %302 = dma.hbm_to_vmem [thread:$0]  %s290, 16, %s300, [#allocation3]
          %s303 = sadd.s32 %s272, 2
          %s304 = sld [smem:[#allocation5 + %s303]]
          %s305 = smul.addr %s304, 16
          %s306 = scalar_lea.hbm %s6, %s305
          %s307 = scalar_lea.vmem [#allocation2], 2
          // Predicated region
          $region53: #{tpu_custom_call.1} parent=43 // pred_check
            _
          $region54: #{tpu_custom_call.1} parent=43 // pred_check_branch
            %309 = sbr.rel target = $region56
          $region55: #{tpu_custom_call.1} parent=43 // pred_region
            %310 = sst [smem:[#allocation10]] [#allocation15]
            %311 = sst [smem:[#allocation11]] [#allocation14]
          $region56: #{tpu_custom_call.1} parent=43 // pred_fallthru
            _
          %313 = shalt.err (0)
          %s315 = sshll.u32 %s307, 4
          %s316 = int_to_ptr.vmem [resolvable:$true] %s315
          %318 = dma.hbm_to_vmem [thread:$0]  %s306, 16, %s316, [#allocation3]
          %s319 = sadd.s32 %s272, 3
          %s320 = sld [smem:[#allocation5 + %s319]]
          %s321 = smul.addr %s320, 16
          %s322 = scalar_lea.hbm %s6, %s321
          %s323 = scalar_lea.vmem [#allocation2], 3
          // Predicated region
          $region57: #{tpu_custom_call.1} parent=43 // pred_check
            _
          $region58: #{tpu_custom_call.1} parent=43 // pred_check_branch
            %325 = sbr.rel target = $region60
          $region59: #{tpu_custom_call.1} parent=43 // pred_region
            %326 = sst [smem:[#allocation10]] [#allocation17]
            %327 = sst [smem:[#allocation11]] [#allocation16]
          $region60: #{tpu_custom_call.1} parent=43 // pred_fallthru
            _
          %329 = shalt.err (0)
          %s331 = sshll.u32 %s323, 4
          %s332 = int_to_ptr.vmem [resolvable:$true] %s331
          %334 = dma.hbm_to_vmem [thread:$0]  %s322, 16, %s332, [#allocation3]
          %s335 = sadd.s32 %s272, 4
          %s336 = sld [smem:[#allocation5 + %s335]]
          %s337 = smul.addr %s336, 16
          %s338 = scalar_lea.hbm %s6, %s337
          %s339 = scalar_lea.vmem [#allocation2], 4
          // Predicated region
          $region61: #{tpu_custom_call.1} parent=43 // pred_check
            _
          $region62: #{tpu_custom_call.1} parent=43 // pred_check_branch
            %341 = sbr.rel target = $region64
          $region63: #{tpu_custom_call.1} parent=43 // pred_region
            %342 = sst [smem:[#allocation10]] [#allocation19]
            %343 = sst [smem:[#allocation11]] [#allocation18]
          $region64: #{tpu_custom_call.1} parent=43 // pred_fallthru
            _
          %345 = shalt.err (0)
          %s347 = sshll.u32 %s339, 4
          %s348 = int_to_ptr.vmem [resolvable:$true] %s347
          %350 = dma.hbm_to_vmem [thread:$0]  %s338, 16, %s348, [#allocation3]
          %s351 = sadd.s32 %s272, 5
          %s352 = sld [smem:[#allocation5 + %s351]]
          %s353 = smul.addr %s352, 16
          %s354 = scalar_lea.hbm %s6, %s353
          %s355 = scalar_lea.vmem [#allocation2], 5
          // Predicated region
          $region65: #{tpu_custom_call.1} parent=43 // pred_check
            _
          $region66: #{tpu_custom_call.1} parent=43 // pred_check_branch
            %357 = sbr.rel target = $region68
          $region67: #{tpu_custom_call.1} parent=43 // pred_region
            %358 = sst [smem:[#allocation10]] [#allocation21]
            %359 = sst [smem:[#allocation11]] [#allocation20]
          $region68: #{tpu_custom_call.1} parent=43 // pred_fallthru
            _
          %361 = shalt.err (0)
          %s363 = sshll.u32 %s355, 4
          %s364 = int_to_ptr.vmem [resolvable:$true] %s363
          %366 = dma.hbm_to_vmem [thread:$0]  %s354, 16, %s364, [#allocation3]
          %s367 = sadd.s32 %s272, 6
          %s368 = sld [smem:[#allocation5 + %s367]]
          %s369 = smul.addr %s368, 16
          %s370 = scalar_lea.hbm %s6, %s369
          %s371 = scalar_lea.vmem [#allocation2], 6
          // Predicated region
          $region69: #{tpu_custom_call.1} parent=43 // pred_check
            _
          $region70: #{tpu_custom_call.1} parent=43 // pred_check_branch
            %373 = sbr.rel target = $region72
          $region71: #{tpu_custom_call.1} parent=43 // pred_region
            %374 = sst [smem:[#allocation10]] [#allocation23]
            %375 = sst [smem:[#allocation11]] [#allocation22]
          $region72: #{tpu_custom_call.1} parent=43 // pred_fallthru
            _
          %377 = shalt.err (0)
          %s379 = sshll.u32 %s371, 4
          %s380 = int_to_ptr.vmem [resolvable:$true] %s379
          %382 = dma.hbm_to_vmem [thread:$0]  %s370, 16, %s380, [#allocation3]
          %s383 = sadd.s32 %s272, 7
          %s384 = sld [smem:[#allocation5 + %s383]]
          %s385 = smul.addr %s384, 16
          %s386 = scalar_lea.hbm %s6, %s385
          %s387 = scalar_lea.vmem [#allocation2], 7
          // Predicated region
          $region73: #{tpu_custom_call.1} parent=43 // pred_check
            _
          $region74: #{tpu_custom_call.1} parent=43 // pred_check_branch
            %389 = sbr.rel target = $region76
          $region75: #{tpu_custom_call.1} parent=43 // pred_region
            %390 = sst [smem:[#allocation10]] [#allocation25]
            %391 = sst [smem:[#allocation11]] [#allocation24]
          $region76: #{tpu_custom_call.1} parent=43 // pred_fallthru
            _
          %393 = shalt.err (0)
          %s395 = sshll.u32 %s387, 4
          %s396 = int_to_ptr.vmem [resolvable:$true] %s395
          %398 = dma.hbm_to_vmem [thread:$0]  %s386, 16, %s396, [#allocation3]
        $region44: #{tpu_custom_call.1} parent=39 // pred_fallthru
          _
        %s399 = sadd.s32 %s32, 1
        %p400 = scmp.lt.s32.totalorder %s399, 2
        // Predicated region
        $region77: #{tpu_custom_call.1} parent=39 // pred_check
          %p401 = pneg %p400
        $region78: #{tpu_custom_call.1} parent=39 // pred_check_branch
          %403 = sbr.rel (%p401) target = $region80
        $region79: #{tpu_custom_call.1} parent=39 // pred_region
          %s404 = ssub.s32 1, %s267
          %s405 = smul.u32 %s399, 8
          %s406 = smul.u32 %s31, 8
          %s407 = sadd.s32 %s405, %s406
          %s408 = sld [smem:[#allocation5 + %s407]]
          %s409 = smul.addr %s408, 16
          %s410 = scalar_lea.hbm %s6, %s409
          %s411 = smul.u32 %s404, 8
          %s412 = scalar_lea.vmem [#allocation2], %s411
          %s413 = scalar_lea.sflag [#allocation3], %s404
          // Predicated region
          $region81: #{tpu_custom_call.1} parent=79 // pred_check
            _
          $region82: #{tpu_custom_call.1} parent=79 // pred_check_branch
            %415 = sbr.rel target = $region84
          $region83: #{tpu_custom_call.1} parent=79 // pred_region
            %416 = sst [smem:[#allocation10]] [#allocation27]
            %417 = sst [smem:[#allocation11]] [#allocation26]
          $region84: #{tpu_custom_call.1} parent=79 // pred_fallthru
            _
          %419 = shalt.err (0)
          %s421 = sshll.u32 %s412, 4
          %s422 = int_to_ptr.vmem [resolvable:$true] %s421
          %424 = dma.hbm_to_vmem [thread:$0]  %s410, 16, %s422, %s413
          %s425 = sadd.s32 %s407, 1
          %s426 = sld [smem:[#allocation5 + %s425]]
          %s427 = smul.addr %s426, 16
          %s428 = scalar_lea.hbm %s6, %s427
          %s429 = sadd.s32 1, %s411
          %s430 = scalar_lea.vmem [#allocation2], %s429
          // Predicated region
          $region85: #{tpu_custom_call.1} parent=79 // pred_check
            _
          $region86: #{tpu_custom_call.1} parent=79 // pred_check_branch
            %432 = sbr.rel target = $region88
          $region87: #{tpu_custom_call.1} parent=79 // pred_region
            %433 = sst [smem:[#allocation10]] [#allocation29]
            %434 = sst [smem:[#allocation11]] [#allocation28]
          $region88: #{tpu_custom_call.1} parent=79 // pred_fallthru
            _
          %436 = shalt.err (0)
          %s438 = sshll.u32 %s430, 4
          %s439 = int_to_ptr.vmem [resolvable:$true] %s438
          %441 = dma.hbm_to_vmem [thread:$0]  %s428, 16, %s439, %s413
          %s442 = sadd.s32 %s407, 2
          %s443 = sld [smem:[#allocation5 + %s442]]
          %s444 = smul.addr %s443, 16
          %s445 = scalar_lea.hbm %s6, %s444
          %s446 = sadd.s32 2, %s411
          %s447 = scalar_lea.vmem [#allocation2], %s446
          // Predicated region
          $region89: #{tpu_custom_call.1} parent=79 // pred_check
            _
          $region90: #{tpu_custom_call.1} parent=79 // pred_check_branch
            %449 = sbr.rel target = $region92
          $region91: #{tpu_custom_call.1} parent=79 // pred_region
            %450 = sst [smem:[#allocation10]] [#allocation31]
            %451 = sst [smem:[#allocation11]] [#allocation30]
          $region92: #{tpu_custom_call.1} parent=79 // pred_fallthru
            _
          %453 = shalt.err (0)
          %s455 = sshll.u32 %s447, 4
          %s456 = int_to_ptr.vmem [resolvable:$true] %s455
          %458 = dma.hbm_to_vmem [thread:$0]  %s445, 16, %s456, %s413
          %s459 = sadd.s32 %s407, 3
          %s460 = sld [smem:[#allocation5 + %s459]]
          %s461 = smul.addr %s460, 16
          %s462 = scalar_lea.hbm %s6, %s461
          %s463 = sadd.s32 3, %s411
          %s464 = scalar_lea.vmem [#allocation2], %s463
          // Predicated region
          $region93: #{tpu_custom_call.1} parent=79 // pred_check
            _
          $region94: #{tpu_custom_call.1} parent=79 // pred_check_branch
            %466 = sbr.rel target = $region96
          $region95: #{tpu_custom_call.1} parent=79 // pred_region
            %467 = sst [smem:[#allocation10]] [#allocation33]
            %468 = sst [smem:[#allocation11]] [#allocation32]
          $region96: #{tpu_custom_call.1} parent=79 // pred_fallthru
            _
          %470 = shalt.err (0)
          %s472 = sshll.u32 %s464, 4
          %s473 = int_to_ptr.vmem [resolvable:$true] %s472
          %475 = dma.hbm_to_vmem [thread:$0]  %s462, 16, %s473, %s413
          %s476 = sadd.s32 %s407, 4
          %s477 = sld [smem:[#allocation5 + %s476]]
          %s478 = smul.addr %s477, 16
          %s479 = scalar_lea.hbm %s6, %s478
          %s480 = sadd.s32 4, %s411
          %s481 = scalar_lea.vmem [#allocation2], %s480
          // Predicated region
          $region97: #{tpu_custom_call.1} parent=79 // pred_check
            _
          $region98: #{tpu_custom_call.1} parent=79 // pred_check_branch
            %483 = sbr.rel target = $region100
          $region99: #{tpu_custom_call.1} parent=79 // pred_region
            %484 = sst [smem:[#allocation10]] [#allocation35]
            %485 = sst [smem:[#allocation11]] [#allocation34]
          $region100: #{tpu_custom_call.1} parent=79 // pred_fallthru
            _
          %487 = shalt.err (0)
          %s489 = sshll.u32 %s481, 4
          %s490 = int_to_ptr.vmem [resolvable:$true] %s489
          %492 = dma.hbm_to_vmem [thread:$0]  %s479, 16, %s490, %s413
          %s493 = sadd.s32 %s407, 5
          %s494 = sld [smem:[#allocation5 + %s493]]
          %s495 = smul.addr %s494, 16
          %s496 = scalar_lea.hbm %s6, %s495
          %s497 = sadd.s32 5, %s411
          %s498 = scalar_lea.vmem [#allocation2], %s497
          // Predicated region
          $region101: #{tpu_custom_call.1} parent=79 // pred_check
            _
          $region102: #{tpu_custom_call.1} parent=79 // pred_check_branch
            %500 = sbr.rel target = $region104
          $region103: #{tpu_custom_call.1} parent=79 // pred_region
            %501 = sst [smem:[#allocation10]] [#allocation37]
            %502 = sst [smem:[#allocation11]] [#allocation36]
          $region104: #{tpu_custom_call.1} parent=79 // pred_fallthru
            _
          %504 = shalt.err (0)
          %s506 = sshll.u32 %s498, 4
          %s507 = int_to_ptr.vmem [resolvable:$true] %s506
          %509 = dma.hbm_to_vmem [thread:$0]  %s496, 16, %s507, %s413
          %s510 = sadd.s32 %s407, 6
          %s511 = sld [smem:[#allocation5 + %s510]]
          %s512 = smul.addr %s511, 16
          %s513 = scalar_lea.hbm %s6, %s512
          %s514 = sadd.s32 6, %s411
          %s515 = scalar_lea.vmem [#allocation2], %s514
          // Predicated region
          $region105: #{tpu_custom_call.1} parent=79 // pred_check
            _
          $region106: #{tpu_custom_call.1} parent=79 // pred_check_branch
            %517 = sbr.rel target = $region108
          $region107: #{tpu_custom_call.1} parent=79 // pred_region
            %518 = sst [smem:[#allocation10]] [#allocation39]
            %519 = sst [smem:[#allocation11]] [#allocation38]
          $region108: #{tpu_custom_call.1} parent=79 // pred_fallthru
            _
          %521 = shalt.err (0)
          %s523 = sshll.u32 %s515, 4
          %s524 = int_to_ptr.vmem [resolvable:$true] %s523
          %526 = dma.hbm_to_vmem [thread:$0]  %s513, 16, %s524, %s413
          %s527 = sadd.s32 %s407, 7
          %s528 = sld [smem:[#allocation5 + %s527]]
          %s529 = smul.addr %s528, 16
          %s530 = scalar_lea.hbm %s6, %s529
          %s531 = sadd.s32 7, %s411
          %s532 = scalar_lea.vmem [#allocation2], %s531
          // Predicated region
          $region109: #{tpu_custom_call.1} parent=79 // pred_check
            _
          $region110: #{tpu_custom_call.1} parent=79 // pred_check_branch
            %534 = sbr.rel target = $region112
          $region111: #{tpu_custom_call.1} parent=79 // pred_region
            %535 = sst [smem:[#allocation10]] [#allocation41]
            %536 = sst [smem:[#allocation11]] [#allocation40]
          $region112: #{tpu_custom_call.1} parent=79 // pred_fallthru
            _
          %538 = shalt.err (0)
          %s540 = sshll.u32 %s532, 4
          %s541 = int_to_ptr.vmem [resolvable:$true] %s540
          %543 = dma.hbm_to_vmem [thread:$0]  %s530, 16, %s541, %s413
        $region80: #{tpu_custom_call.1} parent=39 // pred_fallthru
          _
        %v544 = vld [vmem:[%s259] sm:$0xff]
        %v545 = vld [vmem:[%s264] sm:$0xff]
        %v546 = vld [vmem:[%s3] sm:$0x3]
        %vm547 = vcmp.eq.s32.totalorder %v545, 0
        %v548 = vsel %vm547, 1, 0
        %549 = vset.pattern.permute.xlu0 0
        %550 = vperm.xlu0 %549, %v548
        %v551 = vpop.permute.xlu0 %550
        %vm552 = vcmp.eq.s32.totalorder %v551, 1
        %v553 = vlaneseq
        %v554 = vshrl.u32 %v553, 7
        %v555 = vsub.s32 0, %v554
        %v556 = vrot.slane %v546, %v555
        %v557 = vlaneseq
        %v558 = vshrl.u32 %v557, 7
        %v559 = vsub.s32 1, %v558
        %v560 = vrot.slane %v546, %v559
        %v561 = vsel %vm552, %v556, %v560
        %v562 = vadd.f32 %v544, %v561
        %s563 = smul.u32 %s267, 8
        %s564 = scalar_lea.vmem [#allocation2], %s563
        %s565 = scalar_lea.sflag [#allocation3], %s267
        %s566 = smul.u32 8, 1
        %s567 = sshll.u32 %s566, 4
        %568 = dma.done %s565, %s567
        %v569 = vld [vmem:[%s564] sm:$0xff]
        %v570 = vadd.f32 %v562, %v569
        %571 = vadd.xlane.f32.xlu0 %v570
        %v572 = vpop.xlane.xlu0 %571
        %v573 = vrcp.pop 128.0
        %v574 = vmul.f32 %v572, %v573
        %v575 = vsub.f32 %v570, %v574
        %v576 = vmul.f32 %v575, %v575
        %577 = vadd.xlane.f32.xlu0 %v576
        %v578 = vpop.xlane.xlu0 %577
        %v579 = vmul.f32 %v578, %v573
        %v580 = vadd.f32 %v579, 1e-12
        %v581 = vrsqrt.pop %v580
        %v582 = vmul.f32 %v575, %v581
        %v583 = vld [vmem:[%s4] sm:$0x1]
        %v585 = vlaneseq
        %v586 = vshrl.u32 %v585, 7
        %v587 = vsub.s32 0, %v586
        %v588 = vrot.slane %v583, %v587
        %v590 = vmul.f32 %v582, %v588
        %v591 = vld [vmem:[%s5] sm:$0x1]
        %v593 = vlaneseq
        %v594 = vshrl.u32 %v593, 7
        %v595 = vsub.s32 0, %v594
        %v596 = vrot.slane %v591, %v595
        %v598 = vadd.f32 %v590, %v596
        %599 = vst [vmem:[%s255] sm:$0xff] %v598
        %s600 = sand.u32 %s166, 1
        %s601 = scalar_lea.sflag [#allocation7], %s600
        %s602 = sand.u32 %s166, 1
        %s603 = smul.addr %s602, 8
        %s604 = scalar_lea.vmem [#allocation6], %s603
        // Predicated region
        $region113: #{tpu_custom_call.1} parent=39 // pred_check
          %p605 = pneg %p176
        $region114: #{tpu_custom_call.1} parent=39 // pred_check_branch
          %607 = sbr.rel (%p605) target = $region116
        $region115: #{tpu_custom_call.1} parent=39 // pred_region
          %s608 = sadd.s32 %s32, %s31
          %s610 = ssub.s32 128, 128
          %611 = vsyncadd %s601, %s610
          %s612 = smul.addr %s608, 128
          %s613 = scalar_lea.hbm %s7, %s612
          %s615 = sshll.u32 %s604, 4
          %s616 = int_to_ptr.vmem [resolvable:$true] %s615
          %618 = dma.vmem_to_hbm [thread:$0]  %s616, 128, %s613, %s601
        $region116: #{tpu_custom_call.1} parent=39 // pred_fallthru
          _
      $region40: #{tpu_custom_call.1} parent=5 // pred_fallthru
        _
      %p619 = scmp.le.s32.totalorder 2, %s22
      // Predicated region
      $region117: #{tpu_custom_call.1} parent=5 // pred_check
        %p620 = pneg %p619
      $region118: #{tpu_custom_call.1} parent=5 // pred_check_branch
        %622 = sbr.rel (%p620) target = $region120
      $region119: #{tpu_custom_call.1} parent=5 // pred_region
        %s623 = ssub.s32 %s22, 2
        // Predicated region
        $region121: #{tpu_custom_call.1} parent=119 // pred_check
          %p624 = pneg %p182
        $region122: #{tpu_custom_call.1} parent=119 // pred_check_branch
          %626 = sbr.rel (%p624) target = $region124
        $region123: #{tpu_custom_call.1} parent=119 // pred_region
          %s627 = sand.u32 %s167, 1
          %s628 = scalar_lea.sflag [#allocation7], %s627
          %s629 = sand.u32 %s167, 1
          %s630 = smul.addr %s629, 8
          %s631 = scalar_lea.vmem [#allocation6], %s630
          %632 = dma.done %s628, 128
        $region124: #{tpu_custom_call.1} parent=119 // pred_fallthru
          _
      $region120: #{tpu_custom_call.1} parent=5 // pred_fallthru
        _
    $region6: #{tpu_custom_call.1} parent=1 // loop_footer
      %s26 = sadd.s32 1, %s22
    $region7: #{tpu_custom_call.1} parent=1 // loop_footer_branch
      %21 = sbr.rel target = $region3
    $region8: #{tpu_custom_call.1} parent=1 // loop_exit
      _
    %633 = vsyncpa [#allocation7], 1
    %s634 = scalar_lea.sflag [#allocation7], 1
    %635 = vsyncpa %s634, 1
  %636 = vsyncmov [#allocation3]
  %s637 = vpop.sfrf %636
  %p638 = scmp.eq.s32.totalorder %s637, 0
  %p639 = pneg %p638
  %641 = shalt.err (%p639)
  %s642 = scalar_lea.sflag [#allocation3], 1
  %643 = vsyncmov %s642
  %s644 = vpop.sfrf %643
  %p645 = scmp.eq.s32.totalorder %s644, 0
  %p646 = pneg %p645
  %648 = shalt.err (%p646)

</llo_original>
